<compile_context>
chip_gen: v7x
topology: tpu7x:2x2x1
jax: 0.10.0
libtpu: 0.0.40
codegen_flags: <defaults>
</compile_context>

<pallas_src>
import functools

import jax
import jax.numpy as jnp
from jax import lax
from jax.experimental import pallas as pl
from jax.experimental.pallas import tpu as pltpu


def _round_up(a, b):
    return (a + b - 1) // b * b


@functools.lru_cache(maxsize=1)
def _vmem_capacity_bytes():
    try:
        return int(pltpu.get_tpu_info().vmem_capacity_bytes)
    except Exception:
        return 64 << 20  # conservative fallback: v7x per-TensorCore VMEM


def _budgets():
    cap = _vmem_capacity_bytes()
    if cap >= (100 << 20):          # v5e / v6e: 128 MiB VMEM
        return 92 << 20, 104 << 20  # tile budget, vmem_limit cap
    return 44 << 20, 48 << 20       # v7x: 64 MiB per TC


def _largest_divisor_multiple(n, multiple, cap):
    """Largest d <= cap with d % multiple == 0 and n % d == 0, else None."""
    best = None
    d = multiple
    hi = min(n, cap)
    while d <= hi:
        if n % d == 0:
            best = d
        d += multiple
    return best


def _pick_tn(n, cap):
    """Lane-dense N tile that divides N exactly (never pad the weight)."""
    if n % 128 != 0:
        return n  # block_shape == full array dim is always legal
    cap = max(128, min(cap, n))
    # Aim for >= 2 outer blocks so both v7x TensorCores get work.
    target = min(cap, max(128, n // 2))
    tn = _largest_divisor_multiple(n, 256, target)      # fill 256-wide MXU
    if tn is None:
        tn = _largest_divisor_multiple(n, 128, target)
    if tn is None:
        tn = _largest_divisor_multiple(n, 128, cap) or n
    return tn


def _sanitize_user_tn(n, tn):
    if tn >= n or n % 128 != 0:
        return n
    tn = max(128, (min(tn, n) // 128) * 128)
    while tn >= 128 and n % tn != 0:
        tn -= 128
    return tn if tn >= 128 else n


def _pick_tiles(m, n, k, tm, tn, tk, x_bytes, w_bytes, out_bytes, budget):
    """Pick (tm, tn, tk, single_pass, footprint) within the VMEM budget."""
    tn = _pick_tn(n, cap=2048) if tn is None else _sanitize_user_tn(n, tn)

    m8 = _round_up(max(m, 1), 8)
    tm = min(256, m8) if tm is None else tm
    tm = max(8, _round_up(min(tm, m8), 8))

    if tk is None or tk >= k:
        tk = k                       # single K pass (no accumulator)
    else:
        tk = max(128, _round_up(min(tk, k), 128))

    def footprint(tm_, tn_, tk_):
        single = tk_ >= k
        f = (2 * tm_ * tk_ * x_bytes + 2 * tn_ * tk_ * w_bytes
             + 2 * tm_ * tn_ * out_bytes)
        if not single:
            f += tm_ * tn_ * 4       # f32 accumulator scratch
        return f

    while footprint(tm, tn, tk) > budget:
        if tn >= 256 and (tn // 2) % 128 == 0 and n % (tn // 2) == 0:
            tn //= 2                 # shrink N first: stays single-K-pass
        elif tm > 8:
            tm = max(8, _round_up(tm // 2, 8))
        elif tk > 128:
            tk = max(128, _round_up(tk // 2, 128))   # last resort: K tiling
        else:
            break

    single = tk >= k
    return tm, tn, (k if single else tk), single, footprint(tm, tn, tk)


def _linear_kernel_single(x_ref, w_ref, o_ref, *, compute_dtype):
    """Single K pass: x [tm, K] · w [tn, K] (contract on K) -> o [tm, tn]."""
    xv = x_ref[...].astype(compute_dtype)
    wv = w_ref[...].astype(compute_dtype)
    # TODO(synk): verify via pl.lower_as_mlir that the trans-B contraction does
    # not emit per-tile XLU transposes of the weight tile on older chips.
    o_ref[...] = lax.dot_general(
        xv, wv,
        dimension_numbers=(((1,), (1,)), ((), ())),
        preferred_element_type=jnp.float32,
    ).astype(o_ref.dtype)


def _linear_kernel_acc(x_ref, w_ref, o_ref, acc_ref, *, compute_dtype):
    """K-tiled fallback: accumulate over the (innermost) K grid axis in f32."""
    @pl.when(pl.program_id(2) == 0)
    def _():
        acc_ref[...] = jnp.zeros_like(acc_ref)

    acc_ref[...] += lax.dot_general(
        x_ref[...].astype(compute_dtype), w_ref[...].astype(compute_dtype),
        dimension_numbers=(((1,), (1,)), ((), ())),
        preferred_element_type=jnp.float32,
    )

    @pl.when(pl.program_id(2) == pl.num_programs(2) - 1)
    def _():
        o_ref[...] = acc_ref[...].astype(o_ref.dtype)


@functools.partial(jax.jit, static_argnames=("tm", "tn", "tk", "compute_dtype"))
def detikzify_simple_mlp(x, weight, *, tm=None, tn=None, tk=None,
                         compute_dtype="bfloat16"):
    """y = x @ weight.T, matching nn.Linear(input_size, output_size, bias=False).

    x:      [batch, seq, input_size]
    weight: [output_size, input_size]   (PyTorch Linear layout, NOT transposed)
    returns [batch, seq, output_size]   (dtype of x)
    """
    batch, seq, k = x.shape
    n, k_w = weight.shape
    assert k == k_w, "input_size mismatch"

    out_dtype = x.dtype
    cdtype = jnp.dtype(compute_dtype) if compute_dtype is not None else jnp.dtype(x.dtype)

    m = batch * seq
    x_bytes = jnp.dtype(x.dtype).itemsize          # storage dtypes, not compute
    w_bytes = jnp.dtype(weight.dtype).itemsize
    out_bytes = jnp.dtype(out_dtype).itemsize

    budget, vmem_cap = _budgets()
    tm, tn, tk, single, tile_bytes = _pick_tiles(
        m, n, k, tm, tn, tk, x_bytes, w_bytes, out_bytes, budget)

    mp = _round_up(m, tm)
    kp = k if single else _round_up(k, tk)
    n_blocks = n // tn

    # Only x is padded (cheap); the weight is never padded or copied.
    x2d = x.reshape(m, k)
    if mp > m or kp > k:
        x2d = jnp.pad(x2d, ((0, mp - m), (0, kp - k)))
    w_in = weight
    if kp > k:  # only on the rare K-tiled fallback path
        w_in = jnp.pad(weight, ((0, 0), (0, kp - k)))

    weight_reads = 1 if single else (mp // tm)
    cost = pl.CostEstimate(
        flops=2 * m * n * k,
        transcendentals=0,
        bytes_accessed=(n * k * w_bytes * weight_reads
                        + m * k * x_bytes * n_blocks
                        + m * n * out_bytes),
    )
    vmem_limit = int(min(vmem_cap, max(32 << 20, tile_bytes * 3 // 2)))

    if single:
        kernel = functools.partial(_linear_kernel_single, compute_dtype=cdtype)
        out2d = pl.pallas_call(
            kernel,
            out_shape=jax.ShapeDtypeStruct((mp, n), out_dtype),
            grid_spec=pltpu.PrefetchScalarGridSpec(
                num_scalar_prefetch=0,
                # N outer (parallel, weight-resident), M inner.
                grid=(n_blocks, mp // tm),
                in_specs=[
                    pl.BlockSpec((tm, tk), lambda j, i: (i, 0)),   # x: inner idx
                    pl.BlockSpec((tn, tk), lambda j, i: (j, 0)),   # w: outer only
                ],
                out_specs=pl.BlockSpec((tm, tn), lambda j, i: (i, j)),
            ),
            compiler_params=pltpu.CompilerParams(
                dimension_semantics=("parallel", "arbitrary"),
                vmem_limit_bytes=vmem_limit,
            ),
            cost_estimate=cost,
        )(x2d, w_in)
    else:
        kernel = functools.partial(_linear_kernel_acc, compute_dtype=cdtype)
        out2d = pl.pallas_call(
            kernel,
            out_shape=jax.ShapeDtypeStruct((mp, n), out_dtype),
            grid_spec=pltpu.PrefetchScalarGridSpec(
                num_scalar_prefetch=0,
                grid=(n_blocks, mp // tm, kp // tk),
                in_specs=[
                    pl.BlockSpec((tm, tk), lambda j, i, kk: (i, kk)),
                    pl.BlockSpec((tn, tk), lambda j, i, kk: (j, kk)),
                ],
                out_specs=pl.BlockSpec((tm, tn), lambda j, i, kk: (i, j)),
                scratch_shapes=[pltpu.VMEM((tm, tn), jnp.float32)],
            ),
            compiler_params=pltpu.CompilerParams(
                dimension_semantics=("parallel", "arbitrary", "arbitrary"),
                vmem_limit_bytes=vmem_limit,
            ),
            cost_estimate=cost,
        )(x2d, w_in)

    if mp > m:
        out2d = out2d[:m, :]
    return out2d.reshape(batch, seq, n)


if __name__ == "__main__":
    # Synthetic config: vision_hidden=32, concat_factor=4 -> input_size=128;
    # text_hidden (output_size) = 256. batch=2, seq=8.
    vision_hidden = 32
    concat_factor = 4
    input_size = vision_hidden * concat_factor   # 128
    output_size = 256
    batch, seq = 2, 8

    key = jax.random.PRNGKey(0)
    kx, kw = jax.random.split(key)
    x = jax.random.normal(kx, (batch, seq, input_size), dtype=jnp.float32)
    # Deterministic weight (shape matches nn.Linear(input_size, output_size)).
    weight = jax.random.normal(kw, (output_size, input_size), dtype=jnp.float32) * 0.02

    # Reference (same semantics as torch nn.Linear, bias=False).
    y_ref = jnp.einsum("bsk,nk->bsn", x, weight)

    # Default path: bf16 compute (in-kernel cast), f32 accumulate.
    y = detikzify_simple_mlp(x, weight)
    y = jax.block_until_ready(y)
    assert y.shape == (batch, seq, output_size)
    assert float(jnp.max(jnp.abs(y - y_ref))) < 5e-2, "mismatch vs reference (bf16)"

    # Explicit f32 compute path (tighter tolerance).
    y_f32 = detikzify_simple_mlp(x, weight, compute_dtype="float32")
    y_f32 = jax.block_until_ready(y_f32)
    assert y_f32.shape == (batch, seq, output_size)
    assert float(jnp.max(jnp.abs(y_f32 - y_ref))) < 2e-3, "mismatch vs reference (f32)"

    print("KERNEL_OK")
</pallas_src>

<mosaic_0001>
module attributes {stable_mosaic.version = 11 : i64} {
  func.func @_linear_kernel_single(%arg0: i32, %arg1: i32, %arg2: memref<16x128xf32, #tpu.memory_space<vmem>>, %arg3: memref<128x128xf32, #tpu.memory_space<vmem>>, %arg4: memref<16x128xf32, #tpu.memory_space<vmem>>) attributes {dimension_semantics = [#tpu.dimension_semantics<parallel>, #tpu.dimension_semantics<arbitrary>], iteration_bounds = array<i64: 2, 1>, scalar_prefetch = 0 : i64, scratch_operands = 0 : i64, tpu.core_type = #tpu.core_type<tc>, window_params = [{transform_indices = @transform_0, window_bounds = array<i64: 16, 128>}, {transform_indices = @transform_1, window_bounds = array<i64: 128, 128>}, {transform_indices = @transform_2, window_bounds = array<i64: 16, 128>}]} {
    %c0 = arith.constant 0 : index
    %c0_0 = arith.constant 0 : index
    %0 = vector.load %arg2[%c0, %c0_0] : memref<16x128xf32, #tpu.memory_space<vmem>>, vector<16x128xf32>
    %1 = arith.truncf %0 : vector<16x128xf32> to vector<16x128xbf16>
    %c0_1 = arith.constant 0 : index
    %c0_2 = arith.constant 0 : index
    %2 = vector.load %arg3[%c0_1, %c0_2] : memref<128x128xf32, #tpu.memory_space<vmem>>, vector<128x128xf32>
    %3 = arith.truncf %2 : vector<128x128xf32> to vector<128x128xbf16>
    %cst = arith.constant dense<0.000000e+00> : vector<16x128xf32>
    %4 = tpu.matmul %1, %3, %cst {dimension_numbers = #tpu.dot_dimension_numbers<[1], [1], [0], [0], [0, 0, 1, 0], [], []>} : vector<16x128xbf16>, vector<128x128xbf16>, vector<16x128xf32> -> vector<16x128xf32>
    %c0_3 = arith.constant 0 : index
    %c0_4 = arith.constant 0 : index
    %5 = vector.load %arg4[%c0_3, %c0_4] : memref<16x128xf32, #tpu.memory_space<vmem>>, vector<16x128xf32>
    tpu.vector_store %arg4[%c0_3, %c0_4], %4 {strides = array<i32>} : memref<16x128xf32, #tpu.memory_space<vmem>>, vector<16x128xf32>,
    return
  }
  func.func @transform_0(%arg0: i32, %arg1: i32) -> (i32, i32) {
    %c0_i32 = arith.constant 0 : i32
    %c0_i32_0 = arith.constant 0 : i32
    return %arg1, %c0_i32 : i32, i32
  }
  func.func @transform_1(%arg0: i32, %arg1: i32) -> (i32, i32) {
    %c0_i32 = arith.constant 0 : i32
    %c0_i32_0 = arith.constant 0 : i32
    return %arg0, %c0_i32 : i32, i32
  }
  func.func @transform_2(%arg0: i32, %arg1: i32) -> (i32, i32) {
    %c0_i32 = arith.constant 0 : i32
    return %arg1, %arg0 : i32, i32
  }
}

</mosaic_0001>

<llo_original>
// kernel: detikzify_simple_mlp.1
$region0: #{detikzify_simple_mlp.1}
  #allocation0 [shape = 'u32[]', space=smem, size = 0x4, offset = 0x4, fixed_abs, tag = 'smem constant byte address 0x4 - core index']
  #allocation1 [shape = 'u32[144,128]{1,0:T(1,128)}', space=vmem, size = 0x12000, scoped, tag = 'internal scratch']
  %s0 = inlined_call_operand.hbm [shape: f32[16,128], index: 0, kind: input, shape index: {}]
  %s1 = inlined_call_operand.hbm [shape: f32[256,128], index: 1, kind: input, shape index: {}]
  %s2 = inlined_call_operand.hbm [shape: f32[16,256], index: 2, kind: output, shape index: {}]
  %s3 = sld [smem:[#allocation0]]
  $region49: #{detikzify_simple_mlp.1} parent=0
    _
  %s5 = ssub.s32 1, %s3
  %s6 = scalar_select 0, %s5, %s3
  $region1: #{detikzify_simple_mlp.1} parent=0
    #allocation2 [shape = 'u8[8192]{0}', space=vmem, size = 0x2000, scoped, tag = 'input window, operand 0, single buffered']
    #allocation3 [shape = 's32[2]{0}', space=sflag, size = 0x8, scoped, tag = 'scoped memory for detikzify_simple_mlp.1']
    #allocation4 [shape = 's32[2]{0}', space=sflag, size = 0x8, scoped, tag = 'scoped memory for detikzify_simple_mlp.1']
    #allocation5 [shape = 'u8[131072]{0}', space=vmem, size = 0x20000, scoped, tag = 'input window, operand 1']
    #allocation6 [shape = 's32[2]{0}', space=sflag, size = 0x8, scoped, tag = 'scoped memory for detikzify_simple_mlp.1']
    #allocation7 [shape = 'u8[16384]{0}', space=vmem, size = 0x4000, scoped, tag = 'output window, operand 0']
    %7 = vsyncpa [#allocation3], 0
    %8 = vsyncpa [#allocation6], 0
    %s9 = scalar_lea.sflag [#allocation6], 1
    %10 = vsyncpa %s9, 0
    %11 = vsyncpa [#allocation4], 0
    %s12 = scalar_lea.sflag [#allocation4], 1
    %13 = vsyncpa %s12, 0
    loop: start=0, step=1, limit=4
    $region2: #{detikzify_simple_mlp.1} parent=1 // loop_pre_header
      _
    $region3: #{detikzify_simple_mlp.1} parent=1 // loop_header
      %s15 = sphi 0, %s19
      %p16 = scmp.ge.s32.totalorder %s15, 4
      %s22 = sphi 0, %s34
      %s23 = sphi 0, %s30
      %s24 = sphi 0, %s22
      %s25 = sphi 0, %s23
      %s26 = sphi 0, %s24
      %s27 = sphi 0, %s25
      %s37 = sphi 0, %s39
      %s40 = sphi 0, %s37
      %s41 = sphi 0, %s40
      %s57 = sphi 0, %s41
      %s63 = sphi 0, %s65
      %s66 = sphi 0, %s63
      %s67 = sphi 0, %s66
      %s83 = sphi 0, %s67
      %s91 = sphi 0, %s93
      %s94 = sphi 0, %s91
      %s95 = sphi 0, %s94
      %s111 = sphi 0, %s95
    $region4: #{detikzify_simple_mlp.1} parent=1 // loop_header_branch
      %18 = sbr.rel (%p16) target = $region8
    $region5: #{detikzify_simple_mlp.1} parent=1 // loop_body
      %s20 = ssub.s32 %s15, 1
      %s21 = ssub.s32 %s15, 2
      %s28 = sadd.s32 1, %s23
      %p29 = scmp.ge.s32.totalorder %s28, 1
      %s30 = scalar_select %p29, 0, %s28
      %s31 = sadd.s32 1, %s22
      %s32 = scalar_select %p29, %s31, %s22
      %p33 = scmp.ge.s32.totalorder %s32, 2
      %s34 = scalar_select %p33, 0, %s32
      %s35 = ssub.s32 %s23, %s30
      %p36 = scmp.eq.s32.totalorder %s35, 0
      %s38 = sadd.s32 %s37, 1
      %s39 = scalar_select %p36, %s37, %s38
      %p42 = pneg %p36
      %p43 = scmp.eq.s32.totalorder %s15, 1
      %p44 = por %p42, %p43
      %p45 = scmp.ne.s32.totalorder %s37, %s40
      %p46 = scmp.eq.s32.totalorder %s15, 0
      %p47 = por %p45, %p46
      %p48 = scmp.ne.s32.totalorder %s37, %s40
      %p49 = scmp.eq.s32.totalorder %s20, 1
      %p50 = por %p48, %p49
      %p51 = scmp.ne.s32.totalorder %s40, %s41
      %p52 = scmp.eq.s32.totalorder %s20, 0
      %p53 = por %p51, %p52
      %p54 = scmp.ne.s32.totalorder %s40, %s41
      %p55 = scmp.eq.s32.totalorder %s21, 1
      %p56 = por %p54, %p55
      %p58 = scmp.ne.s32.totalorder %s41, %s57
      %p59 = scmp.eq.s32.totalorder %s21, 0
      %p60 = por %p58, %p59
      %s61 = ssub.s32 %s22, %s34
      %p62 = scmp.eq.s32.totalorder %s61, 0
      %s64 = sadd.s32 %s63, 1
      %s65 = scalar_select %p62, %s63, %s64
      %p68 = pneg %p62
      %p69 = scmp.eq.s32.totalorder %s15, 1
      %p70 = por %p68, %p69
      %p71 = scmp.ne.s32.totalorder %s63, %s66
      %p72 = scmp.eq.s32.totalorder %s15, 0
      %p73 = por %p71, %p72
      %p74 = scmp.ne.s32.totalorder %s63, %s66
      %p75 = scmp.eq.s32.totalorder %s20, 1
      %p76 = por %p74, %p75
      %p77 = scmp.ne.s32.totalorder %s66, %s67
      %p78 = scmp.eq.s32.totalorder %s20, 0
      %p79 = por %p77, %p78
      %p80 = scmp.ne.s32.totalorder %s66, %s67
      %p81 = scmp.eq.s32.totalorder %s21, 1
      %p82 = por %p80, %p81
      %p84 = scmp.ne.s32.totalorder %s67, %s83
      %p85 = scmp.eq.s32.totalorder %s21, 0
      %p86 = por %p84, %p85
      %s87 = ssub.s32 %s23, %s30
      %s88 = ssub.s32 %s22, %s34
      %s89 = sor.u32 %s87, %s88
      %p90 = scmp.eq.s32.totalorder %s89, 0
      %s92 = sadd.s32 %s91, 1
      %s93 = scalar_select %p90, %s91, %s92
      %p96 = pneg %p90
      %p97 = scmp.eq.s32.totalorder %s15, 1
      %p98 = por %p96, %p97
      %p99 = scmp.ne.s32.totalorder %s91, %s94
      %p100 = scmp.eq.s32.totalorder %s15, 0
      %p101 = por %p99, %p100
      %p102 = scmp.ne.s32.totalorder %s91, %s94
      %p103 = scmp.eq.s32.totalorder %s20, 1
      %p104 = por %p102, %p103
      %p105 = scmp.ne.s32.totalorder %s94, %s95
      %p106 = scmp.eq.s32.totalorder %s20, 0
      %p107 = por %p105, %p106
      %p108 = scmp.ne.s32.totalorder %s94, %s95
      %p109 = scmp.eq.s32.totalorder %s21, 1
      %p110 = por %p108, %p109
      %p112 = scmp.ne.s32.totalorder %s95, %s111
      %p113 = scmp.eq.s32.totalorder %s21, 0
      %p114 = por %p112, %p113
      %p115 = scmp.le.s32.totalorder 1, %s15
      %p116 = scmp.lt.s32.totalorder %s15, 3
      %p117 = pnand %p115, %p116
      %p118 = pneg %p117
      // Predicated region
      $region9: #{detikzify_simple_mlp.1} parent=5 // pred_check
        _
      $region10: #{detikzify_simple_mlp.1} parent=5 // pred_check_branch
        %120 = sbr.rel (%p117) target = $region12
      $region11: #{detikzify_simple_mlp.1} parent=5 // pred_region
        %s121 = ssub.s32 %s15, 1
        // Predicated region
        $region13: #{detikzify_simple_mlp.1} parent=11 // pred_check
          %p122 = pneg %p53
        $region14: #{detikzify_simple_mlp.1} parent=11 // pred_check_branch
          %124 = sbr.rel (%p122) target = $region16
        $region15: #{detikzify_simple_mlp.1} parent=11 // pred_region
          %s125 = smul.u32 2, %s25
          %s127 = ssub.s32 256, 256
          %128 = vsyncadd [#allocation3], %s127
          %s129 = smul.addr %s125, 128
          %s130 = scalar_lea.hbm %s0, %s129
          %s131 = sshll.u32 [#allocation2], 4
          %s132 = int_to_ptr.vmem [resolvable:$true] %s131
          %137 = dma.hbm_to_vmem [thread:$0]  %s130, 256, %s132, [#allocation3], 128, 128, 8
        $region16: #{detikzify_simple_mlp.1} parent=11 // pred_fallthru
          _
      $region12: #{detikzify_simple_mlp.1} parent=5 // pred_fallthru
        _
      %p138 = scmp.lt.s32.totalorder %s15, 2
      // Predicated region
      $region17: #{detikzify_simple_mlp.1} parent=5 // pred_check
        %p139 = pneg %p138
      $region18: #{detikzify_simple_mlp.1} parent=5 // pred_check_branch
        %141 = sbr.rel (%p139) target = $region20
      $region19: #{detikzify_simple_mlp.1} parent=5 // pred_region
        // Predicated region
        $region21: #{detikzify_simple_mlp.1} parent=19 // pred_check
          %p142 = pneg %p73
        $region22: #{detikzify_simple_mlp.1} parent=19 // pred_check_branch
          %144 = sbr.rel (%p142) target = $region24
        $region23: #{detikzify_simple_mlp.1} parent=19 // pred_region
          %s145 = sand.u32 %s63, 1
          %s146 = scalar_lea.sflag [#allocation6], %s145
          %s147 = sand.u32 %s63, 1
          %s148 = smul.addr %s147, 128
          %s149 = scalar_lea.vmem [#allocation5], %s148
          %s150 = smul.u32 16, %s22
          %s152 = ssub.s32 2048, 2048
          %153 = vsyncadd %s146, %s152
          %s154 = smul.addr %s150, 128
          %s155 = scalar_lea.hbm %s1, %s154
          %s156 = sshll.u32 %s149, 4
          %s157 = int_to_ptr.vmem [resolvable:$true] %s156
          %162 = dma.hbm_to_vmem [thread:$0]  %s155, 2048, %s157, %s146, 128, 128, 8
        $region24: #{detikzify_simple_mlp.1} parent=19 // pred_fallthru
          _
      $region20: #{detikzify_simple_mlp.1} parent=5 // pred_fallthru
        _
      %p163 = scmp.le.s32.totalorder 1, %s15
      %p164 = scmp.lt.s32.totalorder %s15, 3
      %p165 = pnand %p163, %p164
      %p166 = pneg %p165
      // Predicated region
      $region25: #{detikzify_simple_mlp.1} parent=5 // pred_check
        _
      $region26: #{detikzify_simple_mlp.1} parent=5 // pred_check_branch
        %168 = sbr.rel (%p165) target = $region28
      $region27: #{detikzify_simple_mlp.1} parent=5 // pred_region
        %s169 = ssub.s32 %s15, 1
        // Predicated region
        $region29: #{detikzify_simple_mlp.1} parent=27 // pred_check
          %p170 = pneg %p53
        $region30: #{detikzify_simple_mlp.1} parent=27 // pred_check_branch
          %172 = sbr.rel (%p170) target = $region32
        $region31: #{detikzify_simple_mlp.1} parent=27 // pred_region
          %173 = dma.done [#allocation3], 256
        $region32: #{detikzify_simple_mlp.1} parent=27 // pred_fallthru
          _
        %s174 = sand.u32 %s66, 1
        %s175 = scalar_lea.sflag [#allocation6], %s174
        %s176 = sand.u32 %s66, 1
        %s177 = smul.addr %s176, 128
        %s178 = scalar_lea.vmem [#allocation5], %s177
        // Predicated region
        $region33: #{detikzify_simple_mlp.1} parent=27 // pred_check
          %p179 = pneg %p79
        $region34: #{detikzify_simple_mlp.1} parent=27 // pred_check_branch
          %181 = sbr.rel (%p179) target = $region36
        $region35: #{detikzify_simple_mlp.1} parent=27 // pred_region
          %182 = dma.done %s175, 2048
        $region36: #{detikzify_simple_mlp.1} parent=27 // pred_fallthru
          _
        %p183 = pneg %p53
        %p184 = pneg %p50
        %s185 = sand.u32 %s66, 1
        %s186 = scalar_lea.sflag [#allocation6], %s185
        %s187 = sand.u32 %s66, 1
        %s188 = smul.addr %s187, 128
        %s189 = scalar_lea.vmem [#allocation5], %s188
        %p190 = pneg %p79
        %p191 = pneg %p76
        %p192 = pneg %p107
        %p193 = pneg %p104
        %s194 = sand.u32 %s94, 1
        %s195 = scalar_lea.sflag [#allocation4], %s194
        %s196 = sand.u32 %s94, 1
        %s197 = smul.addr %s196, 16
        %s198 = scalar_lea.vmem [#allocation7], %s197
        %s199 = smul.u32 2, %s25
        %s200 = smul.u32 16, %s24
        %s201 = smul.u32 2, %s25
        %v203 = vld [vmem:[#allocation2] sm:$0xff]
        %v204 = vld [vmem:[#allocation2 + $0x8] sm:$0xff]
        %v205 = vpack.c.bf16 %v204, %v203
        %v206 = vld [vmem:[%s178] sm:$0xff]
        %v207 = vld [vmem:[%s178 + $0x8] sm:$0xff]
        %v208 = vld [vmem:[%s178 + $0x10] sm:$0xff]
        %v209 = vld [vmem:[%s178 + $0x18] sm:$0xff]
        %v210 = vld [vmem:[%s178 + $0x20] sm:$0xff]
        %v211 = vld [vmem:[%s178 + $0x28] sm:$0xff]
        %v212 = vld [vmem:[%s178 + $0x30] sm:$0xff]
        %v213 = vld [vmem:[%s178 + $0x38] sm:$0xff]
        %v214 = vld [vmem:[%s178 + $0x40] sm:$0xff]
        %v215 = vld [vmem:[%s178 + $0x48] sm:$0xff]
        %v216 = vld [vmem:[%s178 + $0x50] sm:$0xff]
        %v217 = vld [vmem:[%s178 + $0x58] sm:$0xff]
        %v218 = vld [vmem:[%s178 + $0x60] sm:$0xff]
        %v219 = vld [vmem:[%s178 + $0x68] sm:$0xff]
        %v220 = vld [vmem:[%s178 + $0x70] sm:$0xff]
        %v221 = vld [vmem:[%s178 + $0x78] sm:$0xff]
        %v222 = vpack.c.bf16 %v207, %v206
        %v223 = vpack.c.bf16 %v209, %v208
        %v224 = vpack.c.bf16 %v211, %v210
        %v225 = vpack.c.bf16 %v213, %v212
        %v226 = vpack.c.bf16 %v215, %v214
        %v227 = vpack.c.bf16 %v217, %v216
        %v228 = vpack.c.bf16 %v219, %v218
        %v229 = vpack.c.bf16 %v221, %v220
        %230 = vmatprep.subr.bf16.mxu0 0
        %231 = vmatpush1.bf16.xpose.msra.mxu0 %v222
        %232 = vmatprep.subr.bf16.mxu0 0
        %233 = vmatpush1.bf16.xpose.msra.mxu0 %v223
        %234 = vmatprep.subr.bf16.mxu0 0
        %235 = vmatpush1.bf16.xpose.msra.mxu0 %v224
        %236 = vmatprep.subr.bf16.mxu0 0
        %237 = vmatpush1.bf16.xpose.msra.mxu0 %v225
        %238 = vmatprep.subr.bf16.mxu0 0
        %239 = vmatpush1.bf16.xpose.msra.mxu0 %v226
        %240 = vmatprep.subr.bf16.mxu0 0
        %241 = vmatpush1.bf16.xpose.msra.mxu0 %v227
        %242 = vmatprep.subr.bf16.mxu0 0
        %243 = vmatpush1.bf16.xpose.msra.mxu0 %v228
        %244 = vmatprep.subr.bf16.mxu0 0
        %245 = vmatpush1.bf16.xpose.msra.mxu0 %v229
        %246 = vmatprep.subr.bf16.mxu0 0
        %247 = vmatpush1.bf16.xpose.msra.mxu0 0
        %248 = vmatprep.subr.bf16.mxu0 0
        %249 = vmatpush1.bf16.xpose.msra.mxu0 0
        %250 = vmatprep.subr.bf16.mxu0 0
        %251 = vmatpush1.bf16.xpose.msra.mxu0 0
        %252 = vmatprep.subr.bf16.mxu0 0
        %253 = vmatpush1.bf16.xpose.msra.mxu0 0
        %254 = vmatprep.subr.bf16.mxu0 0
        %255 = vmatpush1.bf16.xpose.msra.mxu0 0
        %256 = vmatprep.subr.bf16.mxu0 0
        %257 = vmatpush1.bf16.xpose.msra.mxu0 0
        %258 = vmatprep.subr.bf16.mxu0 0
        %259 = vmatpush1.bf16.xpose.msra.mxu0 0
        %260 = vmatprep.subr.bf16.mxu0 0
        %261 = vmatpush1.bf16.xpose.msra.mxu0 0
        %262 = vmatprep.mubr.bf16.mxu0 0
        %263 = vmatmul.mubr.bf16.gmra.mrb[0].mxu0 %v205
        %v264 = vpop.f32.mrb[0].mxu0
        %v265 = vadd.f32 0.0, %v264
        %v266 = vpop.f32.mrb[0].mxu0
        %v267 = vpop.f32.mrb[0].mxu0
        %v268 = vadd.f32 0.0, %v267
        %v269 = vpop.f32.mrb[0].mxu0
        %270 = vdwg.mxu0
        %271 = vst [vmem:[%s198] sm:$0xff] %v265
        %272 = vst [vmem:[%s198 + $0x8] sm:$0xff] %v268
        %s273 = sand.u32 %s94, 1
        %s274 = scalar_lea.sflag [#allocation4], %s273
        %s275 = sand.u32 %s94, 1
        %s276 = smul.addr %s275, 16
        %s277 = scalar_lea.vmem [#allocation7], %s276
        // Predicated region
        $region37: #{detikzify_simple_mlp.1} parent=27 // pred_check
          %p278 = pneg %p104
        $region38: #{detikzify_simple_mlp.1} parent=27 // pred_check_branch
          %280 = sbr.rel (%p278) target = $region40
        $region39: #{detikzify_simple_mlp.1} parent=27 // pred_region
          %s281 = smul.u32 2, %s25
          %s283 = ssub.s32 256, 256
          %284 = vsyncadd %s274, %s283
          %s285 = smul.addr %s281, 2
          %s286 = sadd.s32 %s24, %s285
          %s287 = smul.addr %s286, 128
          %s288 = scalar_lea.hbm %s2, %s287
          %s289 = sshll.u32 %s277, 4
          %s290 = int_to_ptr.vmem [resolvable:$true] %s289
          %295 = dma.vmem_to_hbm [thread:$0]  %s290, 256, %s288, %s274, 128, 256, 8
        $region40: #{detikzify_simple_mlp.1} parent=27 // pred_fallthru
          _
      $region28: #{detikzify_simple_mlp.1} parent=5 // pred_fallthru
        _
      %p296 = scmp.le.s32.totalorder 2, %s15
      // Predicated region
      $region41: #{detikzify_simple_mlp.1} parent=5 // pred_check
        %p297 = pneg %p296
      $region42: #{detikzify_simple_mlp.1} parent=5 // pred_check_branch
        %299 = sbr.rel (%p297) target = $region44
      $region43: #{detikzify_simple_mlp.1} parent=5 // pred_region
        %s300 = ssub.s32 %s15, 2
        // Predicated region
        $region45: #{detikzify_simple_mlp.1} parent=43 // pred_check
          %p301 = pneg %p110
        $region46: #{detikzify_simple_mlp.1} parent=43 // pred_check_branch
          %303 = sbr.rel (%p301) target = $region48
        $region47: #{detikzify_simple_mlp.1} parent=43 // pred_region
          %s304 = sand.u32 %s95, 1
          %s305 = scalar_lea.sflag [#allocation4], %s304
          %s306 = sand.u32 %s95, 1
          %s307 = smul.addr %s306, 16
          %s308 = scalar_lea.vmem [#allocation7], %s307
          %309 = dma.done %s305, 256
        $region48: #{detikzify_simple_mlp.1} parent=43 // pred_fallthru
          _
      $region44: #{detikzify_simple_mlp.1} parent=5 // pred_fallthru
        _
    $region6: #{detikzify_simple_mlp.1} parent=1 // loop_footer
      %s19 = sadd.s32 1, %s15
    $region7: #{detikzify_simple_mlp.1} parent=1 // loop_footer_branch
      %14 = sbr.rel target = $region3
    $region8: #{detikzify_simple_mlp.1} parent=1 // loop_exit
      _
    %310 = vsyncpa [#allocation3], 1
    %s311 = scalar_lea.sflag [#allocation3], 1
    %312 = vsyncpa %s311, 1
    %313 = vsyncpa [#allocation6], 1
    %s314 = scalar_lea.sflag [#allocation6], 1
    %315 = vsyncpa %s314, 1
    %316 = vsyncpa [#allocation4], 1
    %s317 = scalar_lea.sflag [#allocation4], 1
    %318 = vsyncpa %s317, 1

</llo_original>
